<compile_context>
chip_gen: v6e
topology: v6e:2x2x1
jax: 0.10.0
libtpu: 0.0.40
codegen_flags: <defaults>
</compile_context>

<pallas_src>
import functools

import jax
import jax.numpy as jnp
from jax.experimental import pallas as pl
from jax.experimental.pallas import tpu as pltpu

_LANES = 128


def _round_up(x, m):
    return (x + m - 1) // m * m


# ----------------------------- Fused Pallas kernel --------------------------


def _make_fused_kernel(n_layers, hidden, state_width):
    """Builds the fused kernel for a fixed (static) layer count / hidden size.

    Kernel ref layout (inputs then outputs):
      xh0      : (1, in0 + H)       concat(x, h0[0]) prepared in the wrapper
      h0       : (n_layers, H)
      c0       : (n_layers, H)
      per layer l: wcat_l (in_l + H, 4H)  = [W_ih^T ; W_hh^T]
                   b_l    (1, 4H)         = b_ih + b_hh
      lin_w    : (H, out_pad)       zero-padded to 128-lane multiple
      lin_b    : (1, out_pad)
      state_out: (n_layers, state_width)   row l = [h_l | c_l | 0...]
      out      : (1, out_pad)
    """
    four_h = 4 * hidden

    def kernel(*refs):
        xh0_ref, h0_ref, c0_ref = refs[0], refs[1], refs[2]
        rest = refs[3:]
        w_refs = [rest[2 * l] for l in range(n_layers)]
        b_refs = [rest[2 * l + 1] for l in range(n_layers)]
        lin_w_ref = rest[2 * n_layers]
        lin_b_ref = rest[2 * n_layers + 1]
        state_out_ref = rest[2 * n_layers + 2]
        out_ref = rest[2 * n_layers + 3]

        # Built once (hoisted out of the per-layer loop). Gate lane layout is
        # [i | f | g | o]; tanh(x) = 2*sigmoid(2x) - 1, so scale the g lanes by
        # 2 before a single dense sigmoid and fix them up afterwards.
        lane = jax.lax.broadcasted_iota(jnp.int32, (1, four_h), 1)
        is_g = jnp.logical_and(lane >= 2 * hidden, lane < 3 * hidden)
        pre_scale = jnp.where(is_g, jnp.float32(2.0), jnp.float32(1.0))

        pad_w = state_width - 2 * hidden
        zero_pad = jnp.zeros((1, pad_w), jnp.float32) if pad_w > 0 else None

        h_cur = None
        for l in range(n_layers):            # static unrolled layer loop
            if l == 0:
                xh = xh0_ref[...]                                  # (1, in0+H)
            else:
                xh = jnp.concatenate(
                    [h_cur, h0_ref[pl.ds(l, 1), :]], axis=-1)      # (1, 2H)
            c_prev = c0_ref[pl.ds(l, 1), :]                        # (1, H)

            # Single MXU matmul per layer: gates = [x|h] @ [W_ih^T;W_hh^T] + b
            gates = (jnp.dot(xh, w_refs[l][...],
                             preferred_element_type=jnp.float32)
                     + b_refs[l][...])                             # (1, 4H)

            s = jax.nn.sigmoid(gates * pre_scale)     # one dense EUP push
            act = jnp.where(is_g, 2.0 * s - 1.0, s)   # [i, f, tanh(g), o]

            i = act[:, 0 * hidden:1 * hidden]
            f = act[:, 1 * hidden:2 * hidden]
            g = act[:, 2 * hidden:3 * hidden]
            o = act[:, 3 * hidden:4 * hidden]

            c_new = f * c_prev + i * g
            h_new = o * jnp.tanh(c_new)

            # Lane-dense store: one full-width row per layer.
            pieces = [h_new, c_new]
            if zero_pad is not None:
                pieces.append(zero_pad)
            state_out_ref[pl.ds(l, 1), :] = jnp.concatenate(pieces, axis=-1)

            h_cur = h_new                      # feeds the next layer (dropout=0)

        # Final linear + sigmoid, output lanes pre-padded to a 128 multiple.
        out_ref[...] = jax.nn.sigmoid(
            jnp.dot(h_cur, lin_w_ref[...], preferred_element_type=jnp.float32)
            + lin_b_ref[...])

    return kernel


# ------------------------------ Model wrapper --------------------------------


def init_params(key, input_size, hidden_size, output_size, n_layers):
    """Deterministic init mimicking PyTorch's U(-1/sqrt(H), 1/sqrt(H)).

    Weights are stored pre-transposed and pre-concatenated:
      layers[l] = (W_cat (in_l+H, 4H), bias (1, 4H))  with W_cat = [W_ih^T;W_hh^T]
      lin_w_pad (H, out_pad), lin_b_pad (1, out_pad)  zero-padded to 128 lanes.
    """
    bound = 1.0 / jnp.sqrt(jnp.float32(hidden_size))
    params = {"layers": []}
    for layer in range(n_layers):
        in_dim = input_size if layer == 0 else hidden_size
        key, k1, k2, k3, k4 = jax.random.split(key, 5)
        wih_t = jax.random.uniform(k1, (in_dim, 4 * hidden_size),
                                   jnp.float32, -bound, bound)
        whh_t = jax.random.uniform(k2, (hidden_size, 4 * hidden_size),
                                   jnp.float32, -bound, bound)
        b_ih = jax.random.uniform(k3, (1, 4 * hidden_size),
                                  jnp.float32, -bound, bound)
        b_hh = jax.random.uniform(k4, (1, 4 * hidden_size),
                                  jnp.float32, -bound, bound)
        wcat = jnp.concatenate([wih_t, whh_t], axis=0)       # (in+H, 4H)
        params["layers"].append((wcat, b_ih + b_hh))

    key, k1, k2 = jax.random.split(key, 3)
    lin_w_t = jax.random.uniform(k1, (hidden_size, output_size),
                                 jnp.float32, -bound, bound)
    lin_b = jax.random.uniform(k2, (1, output_size), jnp.float32, -bound, bound)
    out_pad = _round_up(output_size, _LANES)
    params["lin_w_pad"] = jnp.pad(lin_w_t, ((0, 0), (0, out_pad - output_size)))
    params["lin_b_pad"] = jnp.pad(lin_b, ((0, 0), (0, out_pad - output_size)))
    return params


@functools.partial(jax.jit, static_argnames=("output_size",))
def lstm_forward(params, inp, hidden, *, output_size):
    """Equivalent of LSTM.forward(input, hidden) from the PyTorch module."""
    h0, c0 = hidden                              # each (n_layers, 1, H)
    n_layers, _, H = h0.shape
    x = inp.reshape(1, -1).astype(jnp.float32)   # like .view(1, 1, -1)
    h0f = h0.reshape(n_layers, H).astype(jnp.float32)
    c0f = c0.reshape(n_layers, H).astype(jnp.float32)
    xh0 = jnp.concatenate([x, h0f[:1]], axis=-1)  # (1, in0 + H), done in XLA

    state_width = _round_up(2 * H, _LANES)
    out_pad = params["lin_w_pad"].shape[-1]

    inputs = [xh0, h0f, c0f]
    for wcat, b in params["layers"]:
        inputs += [wcat, b]
    inputs += [params["lin_w_pad"], params["lin_b_pad"]]

    kernel = _make_fused_kernel(n_layers, H, state_width)
    vmem = pl.BlockSpec(memory_space=pltpu.MemorySpace.VMEM)

    state, out_padded = pl.pallas_call(
        kernel,
        out_shape=(
            jax.ShapeDtypeStruct((n_layers, state_width), jnp.float32),
            jax.ShapeDtypeStruct((1, out_pad), jnp.float32),
        ),
        in_specs=[vmem] * len(inputs),
        out_specs=(vmem, vmem),
    )(*inputs)

    h_n = state[:, :H].reshape(n_layers, 1, H)
    c_n = state[:, H:2 * H].reshape(n_layers, 1, H)
    out = out_padded[:, :output_size]            # (1, output_size)
    return out, (h_n, c_n)


# ----------------------------- Pure-JAX reference ----------------------------


def _reference_forward(params, inp, hidden, output_size):
    h0, c0 = hidden
    n_layers, _, H = h0.shape
    x = inp.reshape(1, -1).astype(jnp.float32)
    h_list, c_list = [], []
    for layer, (wcat, b) in enumerate(params["layers"]):
        in_dim = wcat.shape[0] - H
        wih_t, whh_t = wcat[:in_dim], wcat[in_dim:]
        gates = x @ wih_t + h0[layer] @ whh_t + b
        i = jax.nn.sigmoid(gates[:, 0 * H:1 * H])
        f = jax.nn.sigmoid(gates[:, 1 * H:2 * H])
        g = jnp.tanh(gates[:, 2 * H:3 * H])
        o = jax.nn.sigmoid(gates[:, 3 * H:4 * H])
        c_new = f * c0[layer] + i * g
        h_new = o * jnp.tanh(c_new)
        h_list.append(h_new)
        c_list.append(c_new)
        x = h_new
    lin_w = params["lin_w_pad"][:, :output_size]
    lin_b = params["lin_b_pad"][:, :output_size]
    out = jax.nn.sigmoid(x @ lin_w + lin_b)
    return out, (jnp.stack(h_list, 0), jnp.stack(c_list, 0))


# ----------------------------------- Main ------------------------------------


if __name__ == "__main__":
    input_size, hidden_size, output_size, n_layers = 16, 32, 8, 2

    key = jax.random.PRNGKey(0)
    pkey, xkey, hkey, ckey = jax.random.split(key, 4)
    params = init_params(pkey, input_size, hidden_size, output_size, n_layers)

    inp = jax.random.normal(xkey, (input_size,), jnp.float32)

    # Case 1: reset_state() -> zero hidden / cell state.
    hidden0 = (jnp.zeros((n_layers, 1, hidden_size), jnp.float32),
               jnp.zeros((n_layers, 1, hidden_size), jnp.float32))
    # Case 2: random nonzero state (exercises the W_hh path).
    hidden1 = (0.5 * jax.random.normal(hkey, (n_layers, 1, hidden_size)),
               0.5 * jax.random.normal(ckey, (n_layers, 1, hidden_size)))

    ok = True
    for hidden in (hidden0, hidden1):
        out, (h_n, c_n) = lstm_forward(params, inp, hidden,
                                       output_size=output_size)
        jax.block_until_ready((out, h_n, c_n))

        ref_out, (ref_h, ref_c) = _reference_forward(params, inp, hidden,
                                                     output_size)
        assert out.shape == (1, output_size)
        assert h_n.shape == (n_layers, 1, hidden_size)
        assert c_n.shape == (n_layers, 1, hidden_size)
        ok &= bool(jnp.allclose(out, ref_out, atol=1e-5))
        ok &= bool(jnp.allclose(h_n, ref_h, atol=1e-5))
        ok &= bool(jnp.allclose(c_n, ref_c, atol=1e-5))

    assert ok
    print("KERNEL_OK")
</pallas_src>

<mosaic_0001>
module attributes {stable_mosaic.version = 11 : i64} {
  func.func @kernel(%arg0: memref<1x48xf32, #tpu.memory_space<vmem>>, %arg1: memref<2x32xf32, #tpu.memory_space<vmem>>, %arg2: memref<2x32xf32, #tpu.memory_space<vmem>>, %arg3: memref<48x128xf32, #tpu.memory_space<vmem>>, %arg4: memref<1x128xf32, #tpu.memory_space<vmem>>, %arg5: memref<64x128xf32, #tpu.memory_space<vmem>>, %arg6: memref<1x128xf32, #tpu.memory_space<vmem>>, %arg7: memref<32x128xf32, #tpu.memory_space<vmem>>, %arg8: memref<1x128xf32, #tpu.memory_space<vmem>>, %arg9: memref<2x128xf32, #tpu.memory_space<vmem>>, %arg10: memref<1x128xf32, #tpu.memory_space<vmem>>) attributes {dimension_semantics = [], scalar_prefetch = 0 : i64, scratch_operands = 0 : i64, tpu.core_type = #tpu.core_type<tc>} {
    %0 = tpu.iota {dimensions = array<i32: 1>} : vector<1x128xi32>
    %c64_i32 = arith.constant 64 : i32
    %1 = vector.broadcast %c64_i32 : i32 to vector<1x128xi32>
    %2 = arith.cmpi sge, %0, %1 : vector<1x128xi32>
    %c96_i32 = arith.constant 96 : i32
    %3 = vector.broadcast %c96_i32 : i32 to vector<1x128xi32>
    %4 = arith.cmpi slt, %0, %3 : vector<1x128xi32>
    %5 = arith.andi %2, %4 : vector<1x128xi1>
    %cst = arith.constant 2.000000e+00 : f32
    %cst_0 = arith.constant 1.000000e+00 : f32
    %6 = vector.broadcast %cst : f32 to vector<1x128xf32>
    %7 = vector.broadcast %cst_0 : f32 to vector<1x128xf32>
    %8 = arith.select %5, %6, %7 : vector<1x128xi1>, vector<1x128xf32>
    %cst_1 = arith.constant 0.000000e+00 : f32
    %9 = vector.broadcast %cst_1 : f32 to vector<1x64xf32>
    %c0 = arith.constant 0 : index
    %c0_2 = arith.constant 0 : index
    %10 = vector.load %arg0[%c0, %c0_2] : memref<1x48xf32, #tpu.memory_space<vmem>>, vector<1x48xf32>
    %c0_3 = arith.constant 0 : index
    %c0_4 = arith.constant 0 : index
    %11 = vector.load %arg2[%c0_3, %c0_4] : memref<2x32xf32, #tpu.memory_space<vmem>>, vector<1x32xf32>
    %c0_5 = arith.constant 0 : index
    %c0_6 = arith.constant 0 : index
    %12 = vector.load %arg3[%c0_5, %c0_6] : memref<48x128xf32, #tpu.memory_space<vmem>>, vector<48x128xf32>
    %cst_7 = arith.constant dense<0.000000e+00> : vector<1x128xf32>
    %13 = tpu.matmul %10, %12, %cst_7 {dimension_numbers = #tpu.dot_dimension_numbers<[1], [0], [0], [1], [0, 0, 1, 1], [], []>} : vector<1x48xf32>, vector<48x128xf32>, vector<1x128xf32> -> vector<1x128xf32>
    %c0_8 = arith.constant 0 : index
    %c0_9 = arith.constant 0 : index
    %14 = vector.load %arg4[%c0_8, %c0_9] : memref<1x128xf32, #tpu.memory_space<vmem>>, vector<1x128xf32>
    %15 = arith.addf %13, %14 : vector<1x128xf32>
    %16 = arith.mulf %15, %8 : vector<1x128xf32>
    %17 = arith.negf %16 : vector<1x128xf32>
    %18 = math.exp %17 : vector<1x128xf32>
    %cst_10 = arith.constant 1.000000e+00 : f32
    %19 = vector.broadcast %cst_10 : f32 to vector<1x128xf32>
    %20 = arith.addf %19, %18 : vector<1x128xf32>
    %21 = arith.divf %19, %20 : vector<1x128xf32>
    %cst_11 = arith.constant 2.000000e+00 : f32
    %22 = vector.broadcast %cst_11 : f32 to vector<1x128xf32>
    %23 = arith.mulf %22, %21 : vector<1x128xf32>
    %cst_12 = arith.constant 1.000000e+00 : f32
    %24 = vector.broadcast %cst_12 : f32 to vector<1x128xf32>
    %25 = arith.subf %23, %24 : vector<1x128xf32>
    %26 = arith.select %5, %25, %21 : vector<1x128xi1>, vector<1x128xf32>
    %27 = vector.extract_strided_slice %26 {offsets = [0, 0], sizes = [1, 32], strides = [1, 1]} : vector<1x128xf32> to vector<1x32xf32>
    %28 = vector.extract_strided_slice %26 {offsets = [0, 32], sizes = [1, 32], strides = [1, 1]} : vector<1x128xf32> to vector<1x32xf32>
    %29 = vector.extract_strided_slice %26 {offsets = [0, 64], sizes = [1, 32], strides = [1, 1]} : vector<1x128xf32> to vector<1x32xf32>
    %30 = vector.extract_strided_slice %26 {offsets = [0, 96], sizes = [1, 32], strides = [1, 1]} : vector<1x128xf32> to vector<1x32xf32>
    %31 = arith.mulf %28, %11 : vector<1x32xf32>
    %32 = arith.mulf %27, %29 : vector<1x32xf32>
    %33 = arith.addf %31, %32 : vector<1x32xf32>
    %34 = math.tanh %33 : vector<1x32xf32>
    %35 = arith.mulf %30, %34 : vector<1x32xf32>
    %36 = tpu.concatenate %35, %33, %9 in 1 : vector<1x32xf32>, vector<1x32xf32>, vector<1x64xf32> -> vector<1x128xf32>
    %c0_13 = arith.constant 0 : index
    %c0_14 = arith.constant 0 : index
    %37 = vector.load %arg9[%c0_13, %c0_14] : memref<2x128xf32, #tpu.memory_space<vmem>>, vector<1x128xf32>
    tpu.vector_store %arg9[%c0_13, %c0_14], %36 {strides = array<i32>} : memref<2x128xf32, #tpu.memory_space<vmem>>, vector<1x128xf32>,
    %c1 = arith.constant 1 : index
    %c0_15 = arith.constant 0 : index
    %38 = vector.load %arg1[%c1, %c0_15] : memref<2x32xf32, #tpu.memory_space<vmem>>, vector<1x32xf32>
    %39 = tpu.concatenate %35, %38 in 1 : vector<1x32xf32>, vector<1x32xf32> -> vector<1x64xf32>
    %c1_16 = arith.constant 1 : index
    %c0_17 = arith.constant 0 : index
    %40 = vector.load %arg2[%c1_16, %c0_17] : memref<2x32xf32, #tpu.memory_space<vmem>>, vector<1x32xf32>
    %c0_18 = arith.constant 0 : index
    %c0_19 = arith.constant 0 : index
    %41 = vector.load %arg5[%c0_18, %c0_19] : memref<64x128xf32, #tpu.memory_space<vmem>>, vector<64x128xf32>
    %cst_20 = arith.constant dense<0.000000e+00> : vector<1x128xf32>
    %42 = tpu.matmul %39, %41, %cst_20 {dimension_numbers = #tpu.dot_dimension_numbers<[1], [0], [0], [1], [0, 0, 1, 1], [], []>} : vector<1x64xf32>, vector<64x128xf32>, vector<1x128xf32> -> vector<1x128xf32>
    %c0_21 = arith.constant 0 : index
    %c0_22 = arith.constant 0 : index
    %43 = vector.load %arg6[%c0_21, %c0_22] : memref<1x128xf32, #tpu.memory_space<vmem>>, vector<1x128xf32>
    %44 = arith.addf %42, %43 : vector<1x128xf32>
    %45 = arith.mulf %44, %8 : vector<1x128xf32>
    %46 = arith.negf %45 : vector<1x128xf32>
    %47 = math.exp %46 : vector<1x128xf32>
    %cst_23 = arith.constant 1.000000e+00 : f32
    %48 = vector.broadcast %cst_23 : f32 to vector<1x128xf32>
    %49 = arith.addf %48, %47 : vector<1x128xf32>
    %50 = arith.divf %48, %49 : vector<1x128xf32>
    %cst_24 = arith.constant 2.000000e+00 : f32
    %51 = vector.broadcast %cst_24 : f32 to vector<1x128xf32>
    %52 = arith.mulf %51, %50 : vector<1x128xf32>
    %cst_25 = arith.constant 1.000000e+00 : f32
    %53 = vector.broadcast %cst_25 : f32 to vector<1x128xf32>
    %54 = arith.subf %52, %53 : vector<1x128xf32>
    %55 = arith.select %5, %54, %50 : vector<1x128xi1>, vector<1x128xf32>
    %56 = vector.extract_strided_slice %55 {offsets = [0, 0], sizes = [1, 32], strides = [1, 1]} : vector<1x128xf32> to vector<1x32xf32>
    %57 = vector.extract_strided_slice %55 {offsets = [0, 32], sizes = [1, 32], strides = [1, 1]} : vector<1x128xf32> to vector<1x32xf32>
    %58 = vector.extract_strided_slice %55 {offsets = [0, 64], sizes = [1, 32], strides = [1, 1]} : vector<1x128xf32> to vector<1x32xf32>
    %59 = vector.extract_strided_slice %55 {offsets = [0, 96], sizes = [1, 32], strides = [1, 1]} : vector<1x128xf32> to vector<1x32xf32>
    %60 = arith.mulf %57, %40 : vector<1x32xf32>
    %61 = arith.mulf %56, %58 : vector<1x32xf32>
    %62 = arith.addf %60, %61 : vector<1x32xf32>
    %63 = math.tanh %62 : vector<1x32xf32>
    %64 = arith.mulf %59, %63 : vector<1x32xf32>
    %65 = tpu.concatenate %64, %62, %9 in 1 : vector<1x32xf32>, vector<1x32xf32>, vector<1x64xf32> -> vector<1x128xf32>
    %c1_26 = arith.constant 1 : index
    %c0_27 = arith.constant 0 : index
    %66 = vector.load %arg9[%c1_26, %c0_27] : memref<2x128xf32, #tpu.memory_space<vmem>>, vector<1x128xf32>
    tpu.vector_store %arg9[%c1_26, %c0_27], %65 {strides = array<i32>} : memref<2x128xf32, #tpu.memory_space<vmem>>, vector<1x128xf32>,
    %c0_28 = arith.constant 0 : index
    %c0_29 = arith.constant 0 : index
    %67 = vector.load %arg7[%c0_28, %c0_29] : memref<32x128xf32, #tpu.memory_space<vmem>>, vector<32x128xf32>
    %cst_30 = arith.constant dense<0.000000e+00> : vector<1x128xf32>
    %68 = tpu.matmul %64, %67, %cst_30 {dimension_numbers = #tpu.dot_dimension_numbers<[1], [0], [0], [1], [0, 0, 1, 1], [], []>} : vector<1x32xf32>, vector<32x128xf32>, vector<1x128xf32> -> vector<1x128xf32>
    %c0_31 = arith.constant 0 : index
    %c0_32 = arith.constant 0 : index
    %69 = vector.load %arg8[%c0_31, %c0_32] : memref<1x128xf32, #tpu.memory_space<vmem>>, vector<1x128xf32>
    %70 = arith.addf %68, %69 : vector<1x128xf32>
    %71 = arith.negf %70 : vector<1x128xf32>
    %72 = math.exp %71 : vector<1x128xf32>
    %cst_33 = arith.constant 1.000000e+00 : f32
    %73 = vector.broadcast %cst_33 : f32 to vector<1x128xf32>
    %74 = arith.addf %73, %72 : vector<1x128xf32>
    %75 = arith.divf %73, %74 : vector<1x128xf32>
    %c0_34 = arith.constant 0 : index
    %c0_35 = arith.constant 0 : index
    %76 = vector.load %arg10[%c0_34, %c0_35] : memref<1x128xf32, #tpu.memory_space<vmem>>, vector<1x128xf32>
    tpu.vector_store %arg10[%c0_34, %c0_35], %75 {strides = array<i32>} : memref<1x128xf32, #tpu.memory_space<vmem>>, vector<1x128xf32>,
    return
  }
}

</mosaic_0001>

<llo_original>
// kernel: lstm_forward.1
$region0: #{lstm_forward.1}
  #allocation0 [shape = 'u32[]', space=smem, size = 0x4, offset = 0x4, fixed_abs, tag = 'smem constant byte address 0x4 - core index']
  #allocation1 [shape = 'u32[144,128]{1,0:T(1,128)}', space=vmem, size = 0x12000, scoped, tag = 'internal scratch']
  %s0 = inlined_call_operand.vmem [shape: f32[1,48], index: 0, kind: input, shape index: {}]
  %s1 = inlined_call_operand.vmem [shape: f32[2,32], index: 1, kind: input, shape index: {}]
  %s2 = inlined_call_operand.vmem [shape: f32[2,32], index: 2, kind: input, shape index: {}]
  %s3 = inlined_call_operand.hbm [shape: f32[48,128], index: 3, kind: input, shape index: {}]
  %s4 = inlined_call_operand.vmem [shape: f32[1,128], index: 4, kind: input, shape index: {}]
  %s5 = inlined_call_operand.hbm [shape: f32[64,128], index: 5, kind: input, shape index: {}]
  %s6 = inlined_call_operand.vmem [shape: f32[1,128], index: 6, kind: input, shape index: {}]
  %s7 = inlined_call_operand.hbm [shape: f32[32,128], index: 7, kind: input, shape index: {}]
  %s8 = inlined_call_operand.vmem [shape: f32[1,128], index: 8, kind: input, shape index: {}]
  %s9 = inlined_call_operand.vmem [shape: f32[2,128], index: 9, kind: output, shape index: {0}]
  %s10 = inlined_call_operand.hbm [shape: f32[1,128], index: 10, kind: output, shape index: {1}]
  %11 = xla_tuple %s9, %s10
  %s12 = sld [smem:[#allocation0]]
  $region66: #{lstm_forward.1} parent=0
    _
  %s14 = ssub.s32 1, %s12
  %s15 = scalar_select 0, %s14, %s12
  $region1: #{lstm_forward.1} parent=0
    #allocation2 [shape = 'u8[24576]{0}', space=vmem, size = 0x6000, scoped, tag = 'input window, operand 3, single buffered']
    #allocation3 [shape = 's32[1]{0}', space=sflag, size = 0x4, scoped, tag = 'scoped memory for lstm_forward.1']
    #allocation4 [shape = 's32[1]{0}', space=sflag, size = 0x4, scoped, tag = 'scoped memory for lstm_forward.1']
    #allocation5 [shape = 'u8[32768]{0}', space=vmem, size = 0x8000, scoped, tag = 'input window, operand 5, single buffered']
    #allocation6 [shape = 's32[1]{0}', space=sflag, size = 0x4, scoped, tag = 'scoped memory for lstm_forward.1']
    #allocation7 [shape = 'u8[16384]{0}', space=vmem, size = 0x4000, scoped, tag = 'input window, operand 7, single buffered']
    #allocation8 [shape = 'u8[512]{0}', space=vmem, size = 0x400, scoped, tag = 'output window, operand 1, single buffered']
    %16 = vsyncpa [#allocation3], 0
    %17 = vsyncpa [#allocation6], 0
    %18 = vsyncpa [#allocation4], 0
    // Predicated region
    $region2: #{lstm_forward.1} parent=1 // pred_check
      _
    $region3: #{lstm_forward.1} parent=1 // pred_check_branch
      %20 = sbr.rel (0) target = $region5
    $region4: #{lstm_forward.1} parent=1 // pred_region
      _
    $region5: #{lstm_forward.1} parent=1 // pred_fallthru
      _
    // Predicated region
    $region6: #{lstm_forward.1} parent=1 // pred_check
      _
    $region7: #{lstm_forward.1} parent=1 // pred_check_branch
      %22 = sbr.rel (0) target = $region9
    $region8: #{lstm_forward.1} parent=1 // pred_region
      _
    $region9: #{lstm_forward.1} parent=1 // pred_fallthru
      _
    // Predicated region
    $region10: #{lstm_forward.1} parent=1 // pred_check
      _
    $region11: #{lstm_forward.1} parent=1 // pred_check_branch
      %24 = sbr.rel (0) target = $region13
    $region12: #{lstm_forward.1} parent=1 // pred_region
      _
    $region13: #{lstm_forward.1} parent=1 // pred_fallthru
      _
    // Predicated region
    $region14: #{lstm_forward.1} parent=1 // pred_check
      _
    $region15: #{lstm_forward.1} parent=1 // pred_check_branch
      %26 = sbr.rel (0) target = $region17
    $region16: #{lstm_forward.1} parent=1 // pred_region
      %s28 = ssub.s32 768, 768
      %29 = vsyncadd [#allocation3], %s28
      %s30 = sshll.u32 [#allocation2], 4
      %s31 = int_to_ptr.vmem [resolvable:$true] %s30
      %36 = dma.hbm_to_vmem [thread:$0]  %s3, 768, %s31, [#allocation3], 128, 128, 8
    $region17: #{lstm_forward.1} parent=1 // pred_fallthru
      _
    // Predicated region
    $region18: #{lstm_forward.1} parent=1 // pred_check
      _
    $region19: #{lstm_forward.1} parent=1 // pred_check_branch
      %38 = sbr.rel (0) target = $region21
    $region20: #{lstm_forward.1} parent=1 // pred_region
      _
    $region21: #{lstm_forward.1} parent=1 // pred_fallthru
      _
    // Predicated region
    $region22: #{lstm_forward.1} parent=1 // pred_check
      _
    $region23: #{lstm_forward.1} parent=1 // pred_check_branch
      %40 = sbr.rel (0) target = $region25
    $region24: #{lstm_forward.1} parent=1 // pred_region
      %s42 = ssub.s32 1024, 1024
      %43 = vsyncadd [#allocation6], %s42
      %s44 = sshll.u32 [#allocation5], 4
      %s45 = int_to_ptr.vmem [resolvable:$true] %s44
      %50 = dma.hbm_to_vmem [thread:$0]  %s5, 1024, %s45, [#allocation6], 128, 128, 8
    $region25: #{lstm_forward.1} parent=1 // pred_fallthru
      _
    // Predicated region
    $region26: #{lstm_forward.1} parent=1 // pred_check
      _
    $region27: #{lstm_forward.1} parent=1 // pred_check_branch
      %52 = sbr.rel (0) target = $region29
    $region28: #{lstm_forward.1} parent=1 // pred_region
      _
    $region29: #{lstm_forward.1} parent=1 // pred_fallthru
      _
    // Predicated region
    $region30: #{lstm_forward.1} parent=1 // pred_check
      _
    $region31: #{lstm_forward.1} parent=1 // pred_check_branch
      %54 = sbr.rel (0) target = $region33
    $region32: #{lstm_forward.1} parent=1 // pred_region
      %s56 = ssub.s32 512, 512
      %57 = vsyncadd [#allocation6], %s56
      %s58 = sshll.u32 [#allocation7], 4
      %s59 = int_to_ptr.vmem [resolvable:$true] %s58
      %64 = dma.hbm_to_vmem [thread:$0]  %s7, 512, %s59, [#allocation6], 128, 128, 8
    $region33: #{lstm_forward.1} parent=1 // pred_fallthru
      _
    // Predicated region
    $region34: #{lstm_forward.1} parent=1 // pred_check
      _
    $region35: #{lstm_forward.1} parent=1 // pred_check_branch
      %66 = sbr.rel (0) target = $region37
    $region36: #{lstm_forward.1} parent=1 // pred_region
      _
    $region37: #{lstm_forward.1} parent=1 // pred_fallthru
      _
    // Predicated region
    $region38: #{lstm_forward.1} parent=1 // pred_check
      _
    $region39: #{lstm_forward.1} parent=1 // pred_check_branch
      %68 = sbr.rel (0) target = $region41
    $region40: #{lstm_forward.1} parent=1 // pred_region
      %69 = dma.done [#allocation3], 768
    $region41: #{lstm_forward.1} parent=1 // pred_fallthru
      _
    // Predicated region
    $region42: #{lstm_forward.1} parent=1 // pred_check
      _
    $region43: #{lstm_forward.1} parent=1 // pred_check_branch
      %71 = sbr.rel (0) target = $region45
    $region44: #{lstm_forward.1} parent=1 // pred_region
      %72 = dma.done [#allocation6], 1024
    $region45: #{lstm_forward.1} parent=1 // pred_fallthru
      _
    // Predicated region
    $region46: #{lstm_forward.1} parent=1 // pred_check
      _
    $region47: #{lstm_forward.1} parent=1 // pred_check_branch
      %74 = sbr.rel (0) target = $region49
    $region48: #{lstm_forward.1} parent=1 // pred_region
      %75 = dma.done [#allocation6], 512
    $region49: #{lstm_forward.1} parent=1 // pred_fallthru
      _
    %v76 = vlaneseq
    %v77 = vand.u32 %v76, 127
    %vm78 = vcmp.ge.s32.totalorder %v77, 64
    %vm79 = vcmp.lt.s32.totalorder %v77, 96
    %vm80 = vmand %vm78, %vm79
    %v81 = vsel %vm80, 2.0, 1.0
    %v82 = vld [vmem:[%s0] sm:$0x1]
    %v83 = vld [vmem:[%s2] sm:$0x1]
    %v84 = vld [vmem:[#allocation2] sm:$0xff]
    %v85 = vld [vmem:[#allocation2 + $0x8] sm:$0xff]
    %v86 = vld [vmem:[#allocation2 + $0x10] sm:$0xff]
    %v87 = vld [vmem:[#allocation2 + $0x18] sm:$0xff]
    %v88 = vld [vmem:[#allocation2 + $0x20] sm:$0xff]
    %v89 = vld [vmem:[#allocation2 + $0x28] sm:$0xff]
    %v90 = vld [vmem:[%s4] sm:$0x1]
    %vm91 = vcmask 392192
    %v93 = vsel %vm91, %v82, 0
    %95 = vmatprep.subr.mxu0 0.0
    %96 = vmatpush1.msra.mxu0 0.0
    %97 = vmatprep.subr.mxu0 0.0
    %98 = vmatpush1.msra.mxu0 0.0
    %99 = vmatprep.subr.mxu0 0.0
    %100 = vmatpush1.msra.mxu0 0.0
    %101 = vmatprep.subr.mxu0 0.0
    %102 = vmatpush1.msra.mxu0 0.0
    %103 = vmatprep.subr.mxu0 0.0
    %104 = vmatpush1.msra.mxu0 0.0
    %105 = vmatprep.subr.mxu0 0.0
    %106 = vmatpush1.msra.mxu0 0.0
    %107 = vmatprep.subr.mxu0 0.0
    %108 = vmatpush1.msra.mxu0 0.0
    %109 = vmatprep.subr.mxu0 0.0
    %110 = vmatpush1.msra.mxu0 0.0
    %111 = vmatprep.subr.mxu0 0.0
    %112 = vmatpush1.msra.mxu0 0.0
    %113 = vmatprep.subr.mxu0 0.0
    %114 = vmatpush1.msra.mxu0 0.0
    %115 = vmatprep.subr.mxu0 0.0
    %116 = vmatpush1.msra.mxu0 %v89
    %117 = vmatprep.subr.mxu0 0.0
    %118 = vmatpush1.msra.mxu0 %v88
    %119 = vmatprep.subr.mxu0 0.0
    %120 = vmatpush1.msra.mxu0 %v87
    %121 = vmatprep.subr.mxu0 0.0
    %122 = vmatpush1.msra.mxu0 %v86
    %123 = vmatprep.subr.mxu0 0.0
    %124 = vmatpush1.msra.mxu0 %v85
    %125 = vmatprep.subr.mxu0 0.0
    %126 = vmatpush1.msra.mxu0 %v84
    %127 = vmatprep.subr.mxu0 0.0
    %128 = vmatpush2.msra.mxu0 0.0
    %129 = vmatprep.subr.mxu0 0.0
    %130 = vmatpush2.msra.mxu0 0.0
    %131 = vmatprep.subr.mxu0 0.0
    %132 = vmatpush2.msra.mxu0 0.0
    %133 = vmatprep.subr.mxu0 0.0
    %134 = vmatpush2.msra.mxu0 0.0
    %135 = vmatprep.subr.mxu0 0.0
    %136 = vmatpush2.msra.mxu0 0.0
    %137 = vmatprep.subr.mxu0 0.0
    %138 = vmatpush2.msra.mxu0 0.0
    %139 = vmatprep.subr.mxu0 0.0
    %140 = vmatpush2.msra.mxu0 0.0
    %141 = vmatprep.subr.mxu0 0.0
    %142 = vmatpush2.msra.mxu0 0.0
    %143 = vmatprep.subr.mxu0 0.0
    %144 = vmatpush2.msra.mxu0 0.0
    %145 = vmatprep.subr.mxu0 0.0
    %146 = vmatpush2.msra.mxu0 0.0
    %147 = vmatprep.subr.mxu0 0.0
    %148 = vmatpush2.msra.mxu0 0.0
    %149 = vmatprep.subr.mxu0 0.0
    %150 = vmatpush2.msra.mxu0 0.0
    %151 = vmatprep.subr.mxu0 0.0
    %152 = vmatpush2.msra.mxu0 0.0
    %153 = vmatprep.subr.mxu0 0.0
    %154 = vmatpush2.msra.mxu0 0.0
    %155 = vmatprep.subr.mxu0 0.0
    %156 = vmatpush2.msra.mxu0 0.0
    %157 = vmatprep.subr.mxu0 0.0
    %158 = vmatpush2.msra.mxu0 0.0
    %159 = vmatprep.mubr.f32.mxu0 0.0
    %160 = vmatmul.mubr.f32.gmra.mxu0 %v93
    %v161 = vpop.f32.mrf.mxu0
    %v162 = vadd.f32 %v90, %v161
    %v163 = vpop.f32.mrf.mxu0
    %164 = vdwg.mxu0
    %v165 = vmul.f32 %v162, %v81
    %v166 = vxor.u32 %v165, 2147483648
    %v167 = vmul.f32 %v166, 1.442695
    %v168 = vpow.pop %v167
    %v169 = vadd.f32 %v168, 1.0
    %v170 = vrcp.pop %v169
    %v171 = vmul.f32 1.0, %v170
    %v172 = vmul.f32 %v171, 2.0
    %v173 = vsub.f32 %v172, 1.0
    %v174 = vsel %vm80, %v173, %v171
    %176 = vrot.lane.b32.xlu0 %v83, 32
    %v177 = vpop.permute.xlu0 %176
    %v179 = vmul.f32 %v174, %v177
    %181 = vrot.lane.b32.xlu0 %v174, 64
    %v182 = vpop.permute.xlu0 %181
    %v184 = vmul.f32 %v174, %v182
    %186 = vrot.lane.b32.xlu0 %v184, 32
    %v187 = vpop.permute.xlu0 %186
    %v189 = vadd.f32 %v179, %v187
    %v190 = vtanh.pop %v189
    %192 = vrot.lane.b32.xlu0 %v190, 64
    %v193 = vpop.permute.xlu0 %192
    %v195 = vmul.f32 %v174, %v193
    %197 = vrot.lane.b32.xlu0 %v195, 32
    %v198 = vpop.permute.xlu0 %197
    %vm200 = vcmask 261120
    %v201 = vsel %vm200, %v198, %v189
    %vm202 = vcmask 523264
    %v203 = vsel %vm202, %v201, 0.0
    %204 = vst [vmem:[%s9] sm:$0x1] %v203
    %v205 = vld [vmem:[%s1 + $0x1] sm:$0x1]
    %207 = vrot.lane.b32.xlu0 %v205, 32
    %v208 = vpop.permute.xlu0 %207
    %v210 = vsel %vm200, %v198, %v208
    %v211 = vld [vmem:[%s2 + $0x1] sm:$0x1]
    %v212 = vld [vmem:[#allocation5] sm:$0xff]
    %v213 = vld [vmem:[#allocation5 + $0x8] sm:$0xff]
    %v214 = vld [vmem:[#allocation5 + $0x10] sm:$0xff]
    %v215 = vld [vmem:[#allocation5 + $0x18] sm:$0xff]
    %v216 = vld [vmem:[#allocation5 + $0x20] sm:$0xff]
    %v217 = vld [vmem:[#allocation5 + $0x28] sm:$0xff]
    %v218 = vld [vmem:[#allocation5 + $0x30] sm:$0xff]
    %v219 = vld [vmem:[#allocation5 + $0x38] sm:$0xff]
    %v220 = vld [vmem:[%s6] sm:$0x1]
    %v222 = vsel %vm202, %v210, 0
    %224 = vmatprep.subr.mxu0 0.0
    %225 = vmatpush1.msra.mxu0 0.0
    %226 = vmatprep.subr.mxu0 0.0
    %227 = vmatpush1.msra.mxu0 0.0
    %228 = vmatprep.subr.mxu0 0.0
    %229 = vmatpush1.msra.mxu0 0.0
    %230 = vmatprep.subr.mxu0 0.0
    %231 = vmatpush1.msra.mxu0 0.0
    %232 = vmatprep.subr.mxu0 0.0
    %233 = vmatpush1.msra.mxu0 0.0
    %234 = vmatprep.subr.mxu0 0.0
    %235 = vmatpush1.msra.mxu0 0.0
    %236 = vmatprep.subr.mxu0 0.0
    %237 = vmatpush1.msra.mxu0 0.0
    %238 = vmatprep.subr.mxu0 0.0
    %239 = vmatpush1.msra.mxu0 0.0
    %240 = vmatprep.subr.mxu0 0.0
    %241 = vmatpush1.msra.mxu0 %v219
    %242 = vmatprep.subr.mxu0 0.0
    %243 = vmatpush1.msra.mxu0 %v218
    %244 = vmatprep.subr.mxu0 0.0
    %245 = vmatpush1.msra.mxu0 %v217
    %246 = vmatprep.subr.mxu0 0.0
    %247 = vmatpush1.msra.mxu0 %v216
    %248 = vmatprep.subr.mxu0 0.0
    %249 = vmatpush1.msra.mxu0 %v215
    %250 = vmatprep.subr.mxu0 0.0
    %251 = vmatpush1.msra.mxu0 %v214
    %252 = vmatprep.subr.mxu0 0.0
    %253 = vmatpush1.msra.mxu0 %v213
    %254 = vmatprep.subr.mxu0 0.0
    %255 = vmatpush1.msra.mxu0 %v212
    %256 = vmatprep.subr.mxu0 0.0
    %257 = vmatpush2.msra.mxu0 0.0
    %258 = vmatprep.subr.mxu0 0.0
    %259 = vmatpush2.msra.mxu0 0.0
    %260 = vmatprep.subr.mxu0 0.0
    %261 = vmatpush2.msra.mxu0 0.0
    %262 = vmatprep.subr.mxu0 0.0
    %263 = vmatpush2.msra.mxu0 0.0
    %264 = vmatprep.subr.mxu0 0.0
    %265 = vmatpush2.msra.mxu0 0.0
    %266 = vmatprep.subr.mxu0 0.0
    %267 = vmatpush2.msra.mxu0 0.0
    %268 = vmatprep.subr.mxu0 0.0
    %269 = vmatpush2.msra.mxu0 0.0
    %270 = vmatprep.subr.mxu0 0.0
    %271 = vmatpush2.msra.mxu0 0.0
    %272 = vmatprep.subr.mxu0 0.0
    %273 = vmatpush2.msra.mxu0 0.0
    %274 = vmatprep.subr.mxu0 0.0
    %275 = vmatpush2.msra.mxu0 0.0
    %276 = vmatprep.subr.mxu0 0.0
    %277 = vmatpush2.msra.mxu0 0.0
    %278 = vmatprep.subr.mxu0 0.0
    %279 = vmatpush2.msra.mxu0 0.0
    %280 = vmatprep.subr.mxu0 0.0
    %281 = vmatpush2.msra.mxu0 0.0
    %282 = vmatprep.subr.mxu0 0.0
    %283 = vmatpush2.msra.mxu0 0.0
    %284 = vmatprep.subr.mxu0 0.0
    %285 = vmatpush2.msra.mxu0 0.0
    %286 = vmatprep.subr.mxu0 0.0
    %287 = vmatpush2.msra.mxu0 0.0
    %288 = vmatprep.mubr.f32.mxu0 0.0
    %289 = vmatmul.mubr.f32.gmra.mxu0 %v222
    %v290 = vpop.f32.mrf.mxu0
    %v291 = vadd.f32 %v220, %v290
    %v292 = vpop.f32.mrf.mxu0
    %293 = vdwg.mxu0
    %v294 = vmul.f32 %v291, %v81
    %v295 = vxor.u32 %v294, 2147483648
    %v296 = vmul.f32 %v295, 1.442695
    %v297 = vpow.pop %v296
    %v298 = vadd.f32 %v297, 1.0
    %v299 = vrcp.pop %v298
    %v300 = vmul.f32 1.0, %v299
    %v301 = vmul.f32 %v300, 2.0
    %v302 = vsub.f32 %v301, 1.0
    %v303 = vsel %vm80, %v302, %v300
    %305 = vrot.lane.b32.xlu0 %v211, 32
    %v306 = vpop.permute.xlu0 %305
    %v308 = vmul.f32 %v303, %v306
    %310 = vrot.lane.b32.xlu0 %v303, 64
    %v311 = vpop.permute.xlu0 %310
    %v313 = vmul.f32 %v303, %v311
    %315 = vrot.lane.b32.xlu0 %v313, 32
    %v316 = vpop.permute.xlu0 %315
    %v318 = vadd.f32 %v308, %v316
    %v319 = vtanh.pop %v318
    %321 = vrot.lane.b32.xlu0 %v319, 64
    %v322 = vpop.permute.xlu0 %321
    %v324 = vmul.f32 %v303, %v322
    %326 = vrot.lane.b32.xlu0 %v324, 32
    %v327 = vpop.permute.xlu0 %326
    %v329 = vsel %vm200, %v327, %v318
    %v330 = vsel %vm202, %v329, 0.0
    %331 = vst [vmem:[%s9 + $0x1] sm:$0x1] %v330
    %v332 = vld [vmem:[#allocation7] sm:$0xff]
    %v333 = vld [vmem:[#allocation7 + $0x8] sm:$0xff]
    %v334 = vld [vmem:[#allocation7 + $0x10] sm:$0xff]
    %v335 = vld [vmem:[#allocation7 + $0x18] sm:$0xff]
    %v336 = vld [vmem:[%s8] sm:$0x1]
    %v337 = vsel %vm200, %v327, 0
    %339 = vmatprep.subr.mxu0 0.0
    %340 = vmatpush1.msra.mxu0 0.0
    %341 = vmatprep.subr.mxu0 0.0
    %342 = vmatpush1.msra.mxu0 0.0
    %343 = vmatprep.subr.mxu0 0.0
    %344 = vmatpush1.msra.mxu0 0.0
    %345 = vmatprep.subr.mxu0 0.0
    %346 = vmatpush1.msra.mxu0 0.0
    %347 = vmatprep.subr.mxu0 0.0
    %348 = vmatpush1.msra.mxu0 0.0
    %349 = vmatprep.subr.mxu0 0.0
    %350 = vmatpush1.msra.mxu0 0.0
    %351 = vmatprep.subr.mxu0 0.0
    %352 = vmatpush1.msra.mxu0 0.0
    %353 = vmatprep.subr.mxu0 0.0
    %354 = vmatpush1.msra.mxu0 0.0
    %355 = vmatprep.subr.mxu0 0.0
    %356 = vmatpush1.msra.mxu0 0.0
    %357 = vmatprep.subr.mxu0 0.0
    %358 = vmatpush1.msra.mxu0 0.0
    %359 = vmatprep.subr.mxu0 0.0
    %360 = vmatpush1.msra.mxu0 0.0
    %361 = vmatprep.subr.mxu0 0.0
    %362 = vmatpush1.msra.mxu0 0.0
    %363 = vmatprep.subr.mxu0 0.0
    %364 = vmatpush1.msra.mxu0 %v335
    %365 = vmatprep.subr.mxu0 0.0
    %366 = vmatpush1.msra.mxu0 %v334
    %367 = vmatprep.subr.mxu0 0.0
    %368 = vmatpush1.msra.mxu0 %v333
    %369 = vmatprep.subr.mxu0 0.0
    %370 = vmatpush1.msra.mxu0 %v332
    %371 = vmatprep.subr.mxu0 0.0
    %372 = vmatpush2.msra.mxu0 0.0
    %373 = vmatprep.subr.mxu0 0.0
    %374 = vmatpush2.msra.mxu0 0.0
    %375 = vmatprep.subr.mxu0 0.0
    %376 = vmatpush2.msra.mxu0 0.0
    %377 = vmatprep.subr.mxu0 0.0
    %378 = vmatpush2.msra.mxu0 0.0
    %379 = vmatprep.subr.mxu0 0.0
    %380 = vmatpush2.msra.mxu0 0.0
    %381 = vmatprep.subr.mxu0 0.0
    %382 = vmatpush2.msra.mxu0 0.0
    %383 = vmatprep.subr.mxu0 0.0
    %384 = vmatpush2.msra.mxu0 0.0
    %385 = vmatprep.subr.mxu0 0.0
    %386 = vmatpush2.msra.mxu0 0.0
    %387 = vmatprep.subr.mxu0 0.0
    %388 = vmatpush2.msra.mxu0 0.0
    %389 = vmatprep.subr.mxu0 0.0
    %390 = vmatpush2.msra.mxu0 0.0
    %391 = vmatprep.subr.mxu0 0.0
    %392 = vmatpush2.msra.mxu0 0.0
    %393 = vmatprep.subr.mxu0 0.0
    %394 = vmatpush2.msra.mxu0 0.0
    %395 = vmatprep.subr.mxu0 0.0
    %396 = vmatpush2.msra.mxu0 0.0
    %397 = vmatprep.subr.mxu0 0.0
    %398 = vmatpush2.msra.mxu0 0.0
    %399 = vmatprep.subr.mxu0 0.0
    %400 = vmatpush2.msra.mxu0 0.0
    %401 = vmatprep.subr.mxu0 0.0
    %402 = vmatpush2.msra.mxu0 0.0
    %403 = vmatprep.mubr.f32.mxu0 0.0
    %404 = vmatmul.mubr.f32.gmra.mxu0 %v337
    %v405 = vpop.f32.mrf.mxu0
    %v406 = vadd.f32 %v336, %v405
    %v407 = vpop.f32.mrf.mxu0
    %408 = vdwg.mxu0
    %v409 = vxor.u32 %v406, 2147483648
    %v410 = vmul.f32 %v409, 1.442695
    %v411 = vpow.pop %v410
    %v412 = vadd.f32 %v411, 1.0
    %v413 = vrcp.pop %v412
    %v414 = vmul.f32 1.0, %v413
    %415 = vst [vmem:[#allocation8] sm:$0x1] %v414
    // Predicated region
    $region50: #{lstm_forward.1} parent=1 // pred_check
      _
    $region51: #{lstm_forward.1} parent=1 // pred_check_branch
      %417 = sbr.rel (0) target = $region53
    $region52: #{lstm_forward.1} parent=1 // pred_region
      _
    $region53: #{lstm_forward.1} parent=1 // pred_fallthru
      _
    // Predicated region
    $region54: #{lstm_forward.1} parent=1 // pred_check
      _
    $region55: #{lstm_forward.1} parent=1 // pred_check_branch
      %419 = sbr.rel (0) target = $region57
    $region56: #{lstm_forward.1} parent=1 // pred_region
      %s421 = ssub.s32 16, 16
      %422 = vsyncadd [#allocation4], %s421
      %s424 = sshll.u32 [#allocation8], 4
      %s425 = int_to_ptr.vmem [resolvable:$true] %s424
      %427 = dma.vmem_to_hbm [thread:$0]  %s425, 16, %s10, [#allocation4]
    $region57: #{lstm_forward.1} parent=1 // pred_fallthru
      _
    // Predicated region
    $region58: #{lstm_forward.1} parent=1 // pred_check
      _
    $region59: #{lstm_forward.1} parent=1 // pred_check_branch
      %429 = sbr.rel (0) target = $region61
    $region60: #{lstm_forward.1} parent=1 // pred_region
      _
    $region61: #{lstm_forward.1} parent=1 // pred_fallthru
      _
    // Predicated region
    $region62: #{lstm_forward.1} parent=1 // pred_check
      _
    $region63: #{lstm_forward.1} parent=1 // pred_check_branch
      %431 = sbr.rel (0) target = $region65
    $region64: #{lstm_forward.1} parent=1 // pred_region
      %432 = dma.done [#allocation4], 16
    $region65: #{lstm_forward.1} parent=1 // pred_fallthru
      _
    %433 = vsyncpa [#allocation3], 1
    %434 = vsyncpa [#allocation6], 1
    %435 = vsyncpa [#allocation4], 1

</llo_original>
